<compile_context>
chip_gen: v7x
topology: tpu7x:2x2x1
jax: 0.10.0
libtpu: 0.0.40
codegen_flags: <defaults>
</compile_context>

<pallas_src>
import functools

import numpy as np
import jax
import jax.numpy as jnp
from jax.experimental import pallas as pl
from jax.experimental.pallas import tpu as pltpu

LANES = 128  # padded channel / FC width (lane-dense)


# ---------------------------------------------------------------------------
# Fused Pallas kernel: (both convs as one 128x128x128 matmul) + bias + relu
# + masked max-over-time + FC head.  Everything lane/sublane aligned.
# ---------------------------------------------------------------------------
def fused_cnn_kernel(xcol_ref, w_ref, b_ref, mask_ref, fcw_ref, fcb_ref,
                     o_ref, *, b_pad, l_pad):
    """
    xcol_ref : (B_pad*L_pad, Kmax*F) bf16  wrapper-side im2col (zero padded)
    w_ref    : (Kmax*F, 128)         bf16  packed conv weights (both branches)
    b_ref    : (1, 128)              f32   packed conv biases (zero for pad cols)
    mask_ref : (B_pad*L_pad, 128)    f32   1.0 where (row, channel) is valid
    fcw_ref  : (128, 128)            bf16  zero-padded FC weight
    fcb_ref  : (1, 128)              f32   zero-padded FC bias
    o_ref    : (B_pad, 128)          f32   lane-dense output slab
    """
    cp = w_ref.shape[-1]

    # One MXU matmul for ALL conv branches, f32 accumulation.
    h = jnp.dot(xcol_ref[...], w_ref[...],
                preferred_element_type=jnp.float32)          # (B_pad*L_pad, 128)

    # Bias + ReLU + validity mask (all f32, full-vreg, no iota/select).
    h = jnp.maximum(h + b_ref[...], 0.0) * mask_ref[...]

    # Max-over-time per batch row (sublane regroup + sublane reduce).
    pooled = jnp.max(h.reshape(b_pad, l_pad, cp), axis=1)    # (B_pad, 128)

    # FC head (nn.Dropout is identity in eval mode).  Unmasked (8,128) store.
    o_ref[...] = (jnp.dot(pooled.astype(jnp.bfloat16), fcw_ref[...],
                          preferred_element_type=jnp.float32)
                  + fcb_ref[...])


# ---------------------------------------------------------------------------
# One-time wrapper-side parameter packing (im2col layout, 128-lane zero pad,
# bf16 matmul operands, f32 biases).
# ---------------------------------------------------------------------------
def pack_params(params, kernel_sizes, in_features, c_out, out_features):
    k_max = max(kernel_sizes)
    kf = k_max * in_features
    ctot = len(kernel_sizes) * c_out

    w_packed = jnp.zeros((kf, LANES), jnp.float32)
    b_packed = jnp.zeros((1, LANES), jnp.float32)
    for i, k in enumerate(kernel_sizes):
        w = params[f"conv{i}_w"]                             # (k, F, C)
        if k_max - k:
            # leading zero taps align branch i with the shared k_max-wide im2col
            w = jnp.concatenate(
                [jnp.zeros((k_max - k, in_features, c_out), w.dtype), w], axis=0)
        w_packed = w_packed.at[:, i * c_out:(i + 1) * c_out].set(
            w.reshape(kf, c_out))
        b_packed = b_packed.at[0, i * c_out:(i + 1) * c_out].set(
            params[f"conv{i}_b"])

    fcw = jnp.zeros((LANES, LANES), jnp.float32)
    fcw = fcw.at[:ctot, :out_features].set(params["fc_w"])
    fcb = jnp.zeros((1, LANES), jnp.float32)
    fcb = fcb.at[0, :out_features].set(params["fc_b"])

    return {
        "w": w_packed.astype(jnp.bfloat16),                  # (Kmax*F, 128)
        "b": b_packed,                                       # (1, 128) f32
        "fc_w": fcw.astype(jnp.bfloat16),                    # (128, 128)
        "fc_b": fcb,                                         # (1, 128) f32
    }


# ---------------------------------------------------------------------------
# Forward: wrapper-side bf16 im2col + a single pallas_call.
# ---------------------------------------------------------------------------
@functools.partial(jax.jit, static_argnames=("kernel_sizes", "c_out", "out_features"))
def simple_cnn_forward(x, packed, *, kernel_sizes, c_out, out_features):
    """x: (B, S, F) f32 -> (B, out_features) f32 (eval mode)."""
    B, S, F = x.shape
    k_max = max(kernel_sizes)
    kf = k_max * F
    L = S + k_max - 1
    l_pad = -(-L // 16) * 16                    # bf16 sublane tile alignment
    b_pad = max(-(-B // 8) * 8, 8)              # >= 8 rows for the output store
    rows = b_pad * l_pad

    # --- wrapper-side im2col in bf16: one pad + gather + reshape (XLA) -----
    xb = x.astype(jnp.bfloat16)
    xp = jnp.pad(xb, ((0, b_pad - B),
                      (k_max - 1, k_max - 1 + (l_pad - L)),
                      (0, 0)))                                 # (B_pad, l_pad+k_max-1, F)
    widx = jnp.arange(l_pad)[:, None] + jnp.arange(k_max)[None, :]
    x_col = xp[:, widx, :]                                     # (B_pad, l_pad, k_max, F)
    x_col = x_col.reshape(rows, kf)                            # (128, 128) bf16

    # --- trace-time constant validity mask (L tail + pad rows -> 0) --------
    col_mask = np.zeros((l_pad, LANES), np.float32)
    for i, k in enumerate(kernel_sizes):
        col_mask[:S + k - 1, i * c_out:(i + 1) * c_out] = 1.0
    mask = jnp.asarray(np.tile(col_mask, (b_pad, 1)))          # (rows, 128)

    kernel = functools.partial(fused_cnn_kernel, b_pad=b_pad, l_pad=l_pad)
    out = pl.pallas_call(
        kernel,
        out_shape=jax.ShapeDtypeStruct((b_pad, LANES), jnp.float32),
        grid=(1,),
        in_specs=[
            pl.BlockSpec((rows, kf), lambda i: (0, 0)),
            pl.BlockSpec((kf, LANES), lambda i: (0, 0)),
            pl.BlockSpec((1, LANES), lambda i: (0, 0)),
            pl.BlockSpec((rows, LANES), lambda i: (0, 0)),
            pl.BlockSpec((LANES, LANES), lambda i: (0, 0)),
            pl.BlockSpec((1, LANES), lambda i: (0, 0)),
        ],
        out_specs=pl.BlockSpec((b_pad, LANES), lambda i: (0, 0)),
        compiler_params=pltpu.CompilerParams(dimension_semantics=("arbitrary",)),
    )(x_col, packed["w"], packed["b"], mask, packed["fc_w"], packed["fc_b"])

    return out[:B, :out_features]


# ---------------------------------------------------------------------------
# Pure-JAX reference (per-branch math, mirrors the PyTorch forward). Matmul
# operands cast to bf16 to match the kernel's MXU dtype policy.
# ---------------------------------------------------------------------------
def ref_forward(x, params, kernel_sizes):
    B, S, F = x.shape
    feats = []
    for i, k in enumerate(kernel_sizes):
        w = params[f"conv{i}_w"]                               # (k, F, C)
        xp = jnp.pad(x, ((0, 0), (k - 1, k - 1), (0, 0)))
        L = S + k - 1
        acc = jnp.zeros((B, L, w.shape[-1]), jnp.float32)
        for t in range(k):
            acc = acc + jnp.einsum(
                "blf,fc->blc",
                xp[:, t:t + L, :].astype(jnp.bfloat16),
                w[t].astype(jnp.bfloat16),
                preferred_element_type=jnp.float32)
        acc = jax.nn.relu(acc + params[f"conv{i}_b"])
        feats.append(jnp.max(acc, axis=1))
    h = jnp.concatenate(feats, axis=1)
    out = jnp.dot(h.astype(jnp.bfloat16), params["fc_w"].astype(jnp.bfloat16),
                  preferred_element_type=jnp.float32)
    return out + params["fc_b"]


# ---------------------------------------------------------------------------
if __name__ == "__main__":
    # Module config: num_of_conv=2, in_channels=1, out_channels=8,
    # kernel_size=[3,4], in_features=32, out_features=16, fc_layer=True.
    B, S, F = 2, 8, 32
    C_OUT = 8
    KERNEL_SIZES = (3, 4)
    OUT_FEATURES = 16

    key = jax.random.PRNGKey(0)
    keys = jax.random.split(key, 2 * len(KERNEL_SIZES) + 3)

    params = {}
    for i, k in enumerate(KERNEL_SIZES):
        bound = 1.0 / (1 * k * F) ** 0.5                 # kaiming-uniform-ish bound
        params[f"conv{i}_w"] = jax.random.uniform(
            keys[2 * i], (k, F, C_OUT), jnp.float32, -bound, bound)
        params[f"conv{i}_b"] = jax.random.uniform(
            keys[2 * i + 1], (C_OUT,), jnp.float32, -bound, bound)

    D = len(KERNEL_SIZES) * C_OUT
    bound = 1.0 / D ** 0.5
    params["fc_w"] = jax.random.uniform(keys[-3], (D, OUT_FEATURES),
                                        jnp.float32, -bound, bound)
    params["fc_b"] = jax.random.uniform(keys[-2], (OUT_FEATURES,),
                                        jnp.float32, -bound, bound)

    x = jax.random.normal(keys[-1], (B, S, F), jnp.float32)

    packed = pack_params(params, KERNEL_SIZES, F, C_OUT, OUT_FEATURES)
    out = simple_cnn_forward(x, packed, kernel_sizes=KERNEL_SIZES,
                             c_out=C_OUT, out_features=OUT_FEATURES)
    out = jax.block_until_ready(out)

    ref = jax.block_until_ready(ref_forward(x, params, KERNEL_SIZES))
    assert out.shape == (B, OUT_FEATURES)
    assert jnp.allclose(out, ref, atol=1e-2, rtol=1e-2), (
        "Pallas != reference, max abs diff "
        f"{jnp.max(jnp.abs(out - ref))}")

    print("KERNEL_OK")
</pallas_src>

<mosaic_0001>
module attributes {stable_mosaic.version = 11 : i64} {
  func.func @fused_cnn_kernel(%arg0: i32, %arg1: memref<128x128xbf16, #tpu.memory_space<vmem>>, %arg2: memref<128x128xbf16, #tpu.memory_space<vmem>>, %arg3: memref<1x128xf32, #tpu.memory_space<vmem>>, %arg4: memref<128x128xf32, #tpu.memory_space<vmem>>, %arg5: memref<128x128xbf16, #tpu.memory_space<vmem>>, %arg6: memref<1x128xf32, #tpu.memory_space<vmem>>, %arg7: memref<8x128xf32, #tpu.memory_space<vmem>>) attributes {dimension_semantics = [#tpu.dimension_semantics<arbitrary>], iteration_bounds = array<i64: 1>, scalar_prefetch = 0 : i64, scratch_operands = 0 : i64, tpu.core_type = #tpu.core_type<tc>, window_params = [{pipeline_mode = #tpu.pipeline_mode<synchronous>, transform_indices = @transform_0, window_bounds = array<i64: 128, 128>}, {pipeline_mode = #tpu.pipeline_mode<synchronous>, transform_indices = @transform_1, window_bounds = array<i64: 128, 128>}, {pipeline_mode = #tpu.pipeline_mode<synchronous>, transform_indices = @transform_2, window_bounds = array<i64: 1, 128>}, {pipeline_mode = #tpu.pipeline_mode<synchronous>, transform_indices = @transform_3, window_bounds = array<i64: 128, 128>}, {pipeline_mode = #tpu.pipeline_mode<synchronous>, transform_indices = @transform_4, window_bounds = array<i64: 128, 128>}, {pipeline_mode = #tpu.pipeline_mode<synchronous>, transform_indices = @transform_5, window_bounds = array<i64: 1, 128>}, {pipeline_mode = #tpu.pipeline_mode<synchronous>, transform_indices = @transform_6, window_bounds = array<i64: 8, 128>}]} {
    %c0 = arith.constant 0 : index
    %c0_0 = arith.constant 0 : index
    %0 = vector.load %arg1[%c0, %c0_0] : memref<128x128xbf16, #tpu.memory_space<vmem>>, vector<128x128xbf16>
    %c0_1 = arith.constant 0 : index
    %c0_2 = arith.constant 0 : index
    %1 = vector.load %arg2[%c0_1, %c0_2] : memref<128x128xbf16, #tpu.memory_space<vmem>>, vector<128x128xbf16>
    %cst = arith.constant dense<0.000000e+00> : vector<128x128xf32>
    %2 = tpu.matmul %0, %1, %cst {dimension_numbers = #tpu.dot_dimension_numbers<[1], [0], [0], [1], [0, 0, 1, 1], [], []>} : vector<128x128xbf16>, vector<128x128xbf16>, vector<128x128xf32> -> vector<128x128xf32>
    %c0_3 = arith.constant 0 : index
    %c0_4 = arith.constant 0 : index
    %3 = vector.load %arg3[%c0_3, %c0_4] : memref<1x128xf32, #tpu.memory_space<vmem>>, vector<1x128xf32>
    %4 = vector.broadcast %3 : vector<1x128xf32> to vector<128x128xf32>
    %5 = arith.addf %2, %4 : vector<128x128xf32>
    %cst_5 = arith.constant 0.000000e+00 : f32
    %6 = vector.broadcast %cst_5 : f32 to vector<128x128xf32>
    %7 = arith.maximumf %5, %6 : vector<128x128xf32>
    %c0_6 = arith.constant 0 : index
    %c0_7 = arith.constant 0 : index
    %8 = vector.load %arg4[%c0_6, %c0_7] : memref<128x128xf32, #tpu.memory_space<vmem>>, vector<128x128xf32>
    %9 = arith.mulf %7, %8 : vector<128x128xf32>
    %10 = vector.shape_cast %9 : vector<128x128xf32> to vector<8x16x128xf32>
    %cst_8 = arith.constant dense<0xFF800000> : vector<8x128xf32>
    %11 = vector.multi_reduction <maximumf>, %10, %cst_8 [1] : vector<8x16x128xf32> to vector<8x128xf32>
    %12 = arith.truncf %11 : vector<8x128xf32> to vector<8x128xbf16>
    %c0_9 = arith.constant 0 : index
    %c0_10 = arith.constant 0 : index
    %13 = vector.load %arg5[%c0_9, %c0_10] : memref<128x128xbf16, #tpu.memory_space<vmem>>, vector<128x128xbf16>
    %cst_11 = arith.constant dense<0.000000e+00> : vector<8x128xf32>
    %14 = tpu.matmul %12, %13, %cst_11 {dimension_numbers = #tpu.dot_dimension_numbers<[1], [0], [0], [1], [0, 0, 1, 1], [], []>} : vector<8x128xbf16>, vector<128x128xbf16>, vector<8x128xf32> -> vector<8x128xf32>
    %c0_12 = arith.constant 0 : index
    %c0_13 = arith.constant 0 : index
    %15 = vector.load %arg6[%c0_12, %c0_13] : memref<1x128xf32, #tpu.memory_space<vmem>>, vector<1x128xf32>
    %16 = vector.broadcast %15 : vector<1x128xf32> to vector<8x128xf32>
    %17 = arith.addf %14, %16 : vector<8x128xf32>
    %c0_14 = arith.constant 0 : index
    %c0_15 = arith.constant 0 : index
    %18 = vector.load %arg7[%c0_14, %c0_15] : memref<8x128xf32, #tpu.memory_space<vmem>>, vector<8x128xf32>
    tpu.vector_store %arg7[%c0_14, %c0_15], %17 {strides = array<i32>} : memref<8x128xf32, #tpu.memory_space<vmem>>, vector<8x128xf32>,
    return
  }
  func.func @transform_0(%arg0: i32) -> (i32, i32) {
    %c0_i32 = arith.constant 0 : i32
    %c0_i32_0 = arith.constant 0 : i32
    %c0_i32_1 = arith.constant 0 : i32
    return %c0_i32, %c0_i32_0 : i32, i32
  }
  func.func @transform_1(%arg0: i32) -> (i32, i32) {
    %c0_i32 = arith.constant 0 : i32
    %c0_i32_0 = arith.constant 0 : i32
    %c0_i32_1 = arith.constant 0 : i32
    return %c0_i32, %c0_i32_0 : i32, i32
  }
  func.func @transform_2(%arg0: i32) -> (i32, i32) {
    %c0_i32 = arith.constant 0 : i32
    %c0_i32_0 = arith.constant 0 : i32
    %c0_i32_1 = arith.constant 0 : i32
    return %c0_i32, %c0_i32_0 : i32, i32
  }
  func.func @transform_3(%arg0: i32) -> (i32, i32) {
    %c0_i32 = arith.constant 0 : i32
    %c0_i32_0 = arith.constant 0 : i32
    %c0_i32_1 = arith.constant 0 : i32
    return %c0_i32, %c0_i32_0 : i32, i32
  }
  func.func @transform_4(%arg0: i32) -> (i32, i32) {
    %c0_i32 = arith.constant 0 : i32
    %c0_i32_0 = arith.constant 0 : i32
    %c0_i32_1 = arith.constant 0 : i32
    return %c0_i32, %c0_i32_0 : i32, i32
  }
  func.func @transform_5(%arg0: i32) -> (i32, i32) {
    %c0_i32 = arith.constant 0 : i32
    %c0_i32_0 = arith.constant 0 : i32
    %c0_i32_1 = arith.constant 0 : i32
    return %c0_i32, %c0_i32_0 : i32, i32
  }
  func.func @transform_6(%arg0: i32) -> (i32, i32) {
    %c0_i32 = arith.constant 0 : i32
    %c0_i32_0 = arith.constant 0 : i32
    %c0_i32_1 = arith.constant 0 : i32
    return %c0_i32, %c0_i32_0 : i32, i32
  }
}

</mosaic_0001>

<llo_original>
// kernel: simple_cnn_forward.1
$region0: #{simple_cnn_forward.1}
  #allocation0 [shape = 'u32[]', space=smem, size = 0x4, offset = 0x4, fixed_abs, tag = 'smem constant byte address 0x4 - core index']
  #allocation1 [shape = 'u32[144,128]{1,0:T(1,128)}', space=vmem, size = 0x12000, scoped, tag = 'internal scratch']
  %s0 = inlined_call_operand.vmem [shape: bf16[128,128], index: 0, kind: input, shape index: {}]
  %s1 = inlined_call_operand.vmem [shape: bf16[128,128], index: 1, kind: input, shape index: {}]
  %s2 = inlined_call_operand.vmem [shape: f32[1,128], index: 2, kind: input, shape index: {}]
  %s3 = inlined_call_operand.vmem [shape: f32[128,128], index: 3, kind: input, shape index: {}]
  %s4 = inlined_call_operand.vmem [shape: bf16[128,128], index: 4, kind: input, shape index: {}]
  %s5 = inlined_call_operand.vmem [shape: f32[1,128], index: 5, kind: input, shape index: {}]
  %s6 = inlined_call_operand.vmem [shape: f32[8,128], index: 6, kind: output, shape index: {}]
  %s7 = sld [smem:[#allocation0]]
  $region34: #{simple_cnn_forward.1} parent=0
    _
  %s9 = ssub.s32 1, %s7
  %s10 = scalar_select 0, %s9, %s7
  // Predicated region
  $region2: #{simple_cnn_forward.1} parent=0 // pred_check
    _
  $region3: #{simple_cnn_forward.1} parent=0 // pred_check_branch
    %12 = sbr.rel (0) target = $region5
  $region4: #{simple_cnn_forward.1} parent=0 // pred_region
    _
  $region5: #{simple_cnn_forward.1} parent=0 // pred_fallthru
    _
  // Predicated region
  $region6: #{simple_cnn_forward.1} parent=0 // pred_check
    _
  $region7: #{simple_cnn_forward.1} parent=0 // pred_check_branch
    %14 = sbr.rel (0) target = $region9
  $region8: #{simple_cnn_forward.1} parent=0 // pred_region
    _
  $region9: #{simple_cnn_forward.1} parent=0 // pred_fallthru
    _
  // Predicated region
  $region10: #{simple_cnn_forward.1} parent=0 // pred_check
    _
  $region11: #{simple_cnn_forward.1} parent=0 // pred_check_branch
    %16 = sbr.rel (0) target = $region13
  $region12: #{simple_cnn_forward.1} parent=0 // pred_region
    _
  $region13: #{simple_cnn_forward.1} parent=0 // pred_fallthru
    _
  // Predicated region
  $region14: #{simple_cnn_forward.1} parent=0 // pred_check
    _
  $region15: #{simple_cnn_forward.1} parent=0 // pred_check_branch
    %18 = sbr.rel (0) target = $region17
  $region16: #{simple_cnn_forward.1} parent=0 // pred_region
    _
  $region17: #{simple_cnn_forward.1} parent=0 // pred_fallthru
    _
  // Predicated region
  $region18: #{simple_cnn_forward.1} parent=0 // pred_check
    _
  $region19: #{simple_cnn_forward.1} parent=0 // pred_check_branch
    %20 = sbr.rel (0) target = $region21
  $region20: #{simple_cnn_forward.1} parent=0 // pred_region
    _
  $region21: #{simple_cnn_forward.1} parent=0 // pred_fallthru
    _
  // Predicated region
  $region22: #{simple_cnn_forward.1} parent=0 // pred_check
    _
  $region23: #{simple_cnn_forward.1} parent=0 // pred_check_branch
    %22 = sbr.rel (0) target = $region25
  $region24: #{simple_cnn_forward.1} parent=0 // pred_region
    _
  $region25: #{simple_cnn_forward.1} parent=0 // pred_fallthru
    _
  %v24 = vld [vmem:[%s0] sm:$0xf]
  %v25 = vld [vmem:[%s0 + $0x4] sm:$0xf]
  %v26 = vld [vmem:[%s0 + $0x8] sm:$0xf]
  %v27 = vld [vmem:[%s0 + $0xc] sm:$0xf]
  %v28 = vld [vmem:[%s0 + $0x10] sm:$0xf]
  %v29 = vld [vmem:[%s0 + $0x14] sm:$0xf]
  %v30 = vld [vmem:[%s0 + $0x18] sm:$0xf]
  %v31 = vld [vmem:[%s0 + $0x1c] sm:$0xf]
  %v32 = vld [vmem:[%s0 + $0x20] sm:$0xf]
  %v33 = vld [vmem:[%s0 + $0x24] sm:$0xf]
  %v34 = vld [vmem:[%s0 + $0x28] sm:$0xf]
  %v35 = vld [vmem:[%s0 + $0x2c] sm:$0xf]
  %v36 = vld [vmem:[%s0 + $0x30] sm:$0xf]
  %v37 = vld [vmem:[%s0 + $0x34] sm:$0xf]
  %v38 = vld [vmem:[%s0 + $0x38] sm:$0xf]
  %v39 = vld [vmem:[%s0 + $0x3c] sm:$0xf]
  %v40 = vld [vmem:[%s1] sm:$0xf]
  %v41 = vld [vmem:[%s1 + $0x4] sm:$0xf]
  %v42 = vld [vmem:[%s1 + $0x8] sm:$0xf]
  %v43 = vld [vmem:[%s1 + $0xc] sm:$0xf]
  %v44 = vld [vmem:[%s1 + $0x10] sm:$0xf]
  %v45 = vld [vmem:[%s1 + $0x14] sm:$0xf]
  %v46 = vld [vmem:[%s1 + $0x18] sm:$0xf]
  %v47 = vld [vmem:[%s1 + $0x1c] sm:$0xf]
  %v48 = vld [vmem:[%s1 + $0x20] sm:$0xf]
  %v49 = vld [vmem:[%s1 + $0x24] sm:$0xf]
  %v50 = vld [vmem:[%s1 + $0x28] sm:$0xf]
  %v51 = vld [vmem:[%s1 + $0x2c] sm:$0xf]
  %v52 = vld [vmem:[%s1 + $0x30] sm:$0xf]
  %v53 = vld [vmem:[%s1 + $0x34] sm:$0xf]
  %v54 = vld [vmem:[%s1 + $0x38] sm:$0xf]
  %v55 = vld [vmem:[%s1 + $0x3c] sm:$0xf]
  %v56 = vld [vmem:[%s2] sm:$0x1]
  %v58 = vlaneseq
  %v59 = vshrl.u32 %v58, 7
  %v60 = vsub.s32 0, %v59
  %v61 = vrot.slane %v56, %v60
  %v79 = vunpack.c.l.b16 %v24
  %v80 = vunpack.c.l.b16 %v25
  %v81 = vunpack.c.l.b16 %v26
  %v82 = vunpack.c.l.b16 %v27
  %v83 = vunpack.c.l.b16 %v28
  %v84 = vunpack.c.l.b16 %v29
  %v85 = vunpack.c.l.b16 %v30
  %v86 = vunpack.c.l.b16 %v31
  %v87 = vunpack.c.l.b16 %v32
  %v88 = vunpack.c.l.b16 %v33
  %v89 = vunpack.c.l.b16 %v34
  %v90 = vunpack.c.l.b16 %v35
  %v91 = vunpack.c.l.b16 %v36
  %v92 = vunpack.c.l.b16 %v37
  %v93 = vunpack.c.l.b16 %v38
  %v94 = vunpack.c.l.b16 %v39
  %v95 = vpack.c.b16 %v80, %v79
  %v96 = vpack.c.b16 %v82, %v81
  %v97 = vpack.c.b16 %v84, %v83
  %v98 = vpack.c.b16 %v86, %v85
  %v99 = vpack.c.b16 %v88, %v87
  %v100 = vpack.c.b16 %v90, %v89
  %v101 = vpack.c.b16 %v92, %v91
  %v102 = vpack.c.b16 %v94, %v93
  %v127 = vunpack.c.l.b16 %v40
  %v128 = vunpack.c.l.b16 %v41
  %v129 = vunpack.c.l.b16 %v42
  %v130 = vunpack.c.l.b16 %v43
  %v131 = vunpack.c.l.b16 %v44
  %v132 = vunpack.c.l.b16 %v45
  %v133 = vunpack.c.l.b16 %v46
  %v134 = vunpack.c.l.b16 %v47
  %v135 = vunpack.c.l.b16 %v48
  %v136 = vunpack.c.l.b16 %v49
  %v137 = vunpack.c.l.b16 %v50
  %v138 = vunpack.c.l.b16 %v51
  %v139 = vunpack.c.l.b16 %v52
  %v140 = vunpack.c.l.b16 %v53
  %v141 = vunpack.c.l.b16 %v54
  %v142 = vunpack.c.l.b16 %v55
  %v143 = vpack.c.b16 %v128, %v127
  %v144 = vpack.c.b16 %v130, %v129
  %v145 = vpack.c.b16 %v132, %v131
  %v146 = vpack.c.b16 %v134, %v133
  %v147 = vpack.c.b16 %v136, %v135
  %v148 = vpack.c.b16 %v138, %v137
  %v149 = vpack.c.b16 %v140, %v139
  %v150 = vpack.c.b16 %v142, %v141
  %159 = vmatprep.subr.bf16.mxu0 0
  %160 = vmatpush1.bf16.msra.mxu0 %v143
  %161 = vmatprep.subr.bf16.mxu0 0
  %162 = vmatpush1.bf16.msra.mxu0 %v144
  %163 = vmatprep.subr.bf16.mxu0 0
  %164 = vmatpush1.bf16.msra.mxu0 %v145
  %165 = vmatprep.subr.bf16.mxu0 0
  %166 = vmatpush1.bf16.msra.mxu0 %v146
  %167 = vmatprep.subr.bf16.mxu0 0
  %168 = vmatpush1.bf16.msra.mxu0 %v147
  %169 = vmatprep.subr.bf16.mxu0 0
  %170 = vmatpush1.bf16.msra.mxu0 %v148
  %171 = vmatprep.subr.bf16.mxu0 0
  %172 = vmatpush1.bf16.msra.mxu0 %v149
  %173 = vmatprep.subr.bf16.mxu0 0
  %174 = vmatpush1.bf16.msra.mxu0 %v150
  %175 = vmatprep.subr.bf16.mxu0 0
  %176 = vmatpush1.bf16.msra.mxu0 0
  %177 = vmatprep.subr.bf16.mxu0 0
  %178 = vmatpush1.bf16.msra.mxu0 0
  %179 = vmatprep.subr.bf16.mxu0 0
  %180 = vmatpush1.bf16.msra.mxu0 0
  %181 = vmatprep.subr.bf16.mxu0 0
  %182 = vmatpush1.bf16.msra.mxu0 0
  %183 = vmatprep.subr.bf16.mxu0 0
  %184 = vmatpush1.bf16.msra.mxu0 0
  %185 = vmatprep.subr.bf16.mxu0 0
  %186 = vmatpush1.bf16.msra.mxu0 0
  %187 = vmatprep.subr.bf16.mxu0 0
  %188 = vmatpush1.bf16.msra.mxu0 0
  %189 = vmatprep.subr.bf16.mxu0 0
  %190 = vmatpush1.bf16.msra.mxu0 0
  %191 = vmatprep.mubr.bf16.mxu0 0
  %192 = vmatmul.mubr.bf16.gmra.mrb[0].mxu0 %v95
  %v193 = vpop.f32.mrb[0].mxu0
  %v194 = vadd.f32 %v61, %v193
  %v195 = vpop.f32.mrb[0].mxu0
  %v196 = vpop.f32.mrb[0].mxu0
  %v197 = vadd.f32 %v61, %v196
  %v198 = vpop.f32.mrb[0].mxu0
  %199 = vmatprep.mubr.bf16.mxu0 0
  %200 = vmatmul.mubr.bf16.gmra.mrb[0].mxu0 %v96
  %v201 = vpop.f32.mrb[0].mxu0
  %v202 = vadd.f32 %v61, %v201
  %v203 = vpop.f32.mrb[0].mxu0
  %v204 = vpop.f32.mrb[0].mxu0
  %v205 = vadd.f32 %v61, %v204
  %v206 = vpop.f32.mrb[0].mxu0
  %207 = vmatprep.mubr.bf16.mxu0 0
  %208 = vmatmul.mubr.bf16.gmra.mrb[0].mxu0 %v97
  %v209 = vpop.f32.mrb[0].mxu0
  %v210 = vadd.f32 %v61, %v209
  %v211 = vpop.f32.mrb[0].mxu0
  %v212 = vpop.f32.mrb[0].mxu0
  %v213 = vadd.f32 %v61, %v212
  %v214 = vpop.f32.mrb[0].mxu0
  %215 = vmatprep.mubr.bf16.mxu0 0
  %216 = vmatmul.mubr.bf16.gmra.mrb[0].mxu0 %v98
  %v217 = vpop.f32.mrb[0].mxu0
  %v218 = vadd.f32 %v61, %v217
  %v219 = vpop.f32.mrb[0].mxu0
  %v220 = vpop.f32.mrb[0].mxu0
  %v221 = vadd.f32 %v61, %v220
  %v222 = vpop.f32.mrb[0].mxu0
  %223 = vmatprep.mubr.bf16.mxu0 0
  %224 = vmatmul.mubr.bf16.gmra.mrb[0].mxu0 %v99
  %v225 = vpop.f32.mrb[0].mxu0
  %v226 = vadd.f32 %v61, %v225
  %v227 = vpop.f32.mrb[0].mxu0
  %v228 = vpop.f32.mrb[0].mxu0
  %v229 = vadd.f32 %v61, %v228
  %v230 = vpop.f32.mrb[0].mxu0
  %231 = vmatprep.mubr.bf16.mxu0 0
  %232 = vmatmul.mubr.bf16.gmra.mrb[0].mxu0 %v100
  %v233 = vpop.f32.mrb[0].mxu0
  %v234 = vadd.f32 %v61, %v233
  %v235 = vpop.f32.mrb[0].mxu0
  %v236 = vpop.f32.mrb[0].mxu0
  %v237 = vadd.f32 %v61, %v236
  %v238 = vpop.f32.mrb[0].mxu0
  %239 = vmatprep.mubr.bf16.mxu0 0
  %240 = vmatmul.mubr.bf16.gmra.mrb[0].mxu0 %v101
  %v241 = vpop.f32.mrb[0].mxu0
  %v242 = vadd.f32 %v61, %v241
  %v243 = vpop.f32.mrb[0].mxu0
  %v244 = vpop.f32.mrb[0].mxu0
  %v245 = vadd.f32 %v61, %v244
  %v246 = vpop.f32.mrb[0].mxu0
  %247 = vmatprep.mubr.bf16.mxu0 0
  %248 = vmatmul.mubr.bf16.gmra.mrb[0].mxu0 %v102
  %v249 = vpop.f32.mrb[0].mxu0
  %v250 = vadd.f32 %v61, %v249
  %v251 = vpop.f32.mrb[0].mxu0
  %v252 = vpop.f32.mrb[0].mxu0
  %v253 = vadd.f32 %v61, %v252
  %v254 = vpop.f32.mrb[0].mxu0
  %255 = vdwg.mxu0
  %v256 = vmax.f32 %v194, 0.0
  %v257 = vmax.f32 %v197, 0.0
  %v258 = vmax.f32 %v202, 0.0
  %v259 = vmax.f32 %v205, 0.0
  %v260 = vmax.f32 %v210, 0.0
  %v261 = vmax.f32 %v213, 0.0
  %v262 = vmax.f32 %v218, 0.0
  %v263 = vmax.f32 %v221, 0.0
  %v264 = vmax.f32 %v226, 0.0
  %v265 = vmax.f32 %v229, 0.0
  %v266 = vmax.f32 %v234, 0.0
  %v267 = vmax.f32 %v237, 0.0
  %v268 = vmax.f32 %v242, 0.0
  %v269 = vmax.f32 %v245, 0.0
  %v270 = vmax.f32 %v250, 0.0
  %v271 = vmax.f32 %v253, 0.0
  %v272 = vld [vmem:[%s3] sm:$0xff]
  %v273 = vld [vmem:[%s3 + $0x8] sm:$0xff]
  %v274 = vld [vmem:[%s3 + $0x10] sm:$0xff]
  %v275 = vld [vmem:[%s3 + $0x18] sm:$0xff]
  %v276 = vld [vmem:[%s3 + $0x20] sm:$0xff]
  %v277 = vld [vmem:[%s3 + $0x28] sm:$0xff]
  %v278 = vld [vmem:[%s3 + $0x30] sm:$0xff]
  %v279 = vld [vmem:[%s3 + $0x38] sm:$0xff]
  %v280 = vld [vmem:[%s3 + $0x40] sm:$0xff]
  %v281 = vld [vmem:[%s3 + $0x48] sm:$0xff]
  %v282 = vld [vmem:[%s3 + $0x50] sm:$0xff]
  %v283 = vld [vmem:[%s3 + $0x58] sm:$0xff]
  %v284 = vld [vmem:[%s3 + $0x60] sm:$0xff]
  %v285 = vld [vmem:[%s3 + $0x68] sm:$0xff]
  %v286 = vld [vmem:[%s3 + $0x70] sm:$0xff]
  %v287 = vld [vmem:[%s3 + $0x78] sm:$0xff]
  %v288 = vmul.f32 %v256, %v272
  %v289 = vmul.f32 %v257, %v273
  %v290 = vmul.f32 %v258, %v274
  %v291 = vmul.f32 %v259, %v275
  %v292 = vmul.f32 %v260, %v276
  %v293 = vmul.f32 %v261, %v277
  %v294 = vmul.f32 %v262, %v278
  %v295 = vmul.f32 %v263, %v279
  %v296 = vmul.f32 %v264, %v280
  %v297 = vmul.f32 %v265, %v281
  %v298 = vmul.f32 %v266, %v282
  %v299 = vmul.f32 %v267, %v283
  %v300 = vmul.f32 %v268, %v284
  %v301 = vmul.f32 %v269, %v285
  %v302 = vmul.f32 %v270, %v286
  %v303 = vmul.f32 %v271, %v287
  %v304 = vmax.f32 %v288, %v289
  %v305 = vrot.slane %v304, 4
  %v306 = vmax.f32 %v304, %v305
  %v307 = vrot.slane %v306, 2
  %v308 = vmax.f32 %v306, %v307
  %v309 = vrot.slane %v308, 1
  %v310 = vmax.f32 %v308, %v309
  %v311 = vmax.f32 %v290, %v291
  %v312 = vrot.slane %v311, 4
  %v313 = vmax.f32 %v311, %v312
  %v314 = vrot.slane %v313, 2
  %v315 = vmax.f32 %v313, %v314
  %v316 = vrot.slane %v315, 1
  %v317 = vmax.f32 %v315, %v316
  %v318 = vmax.f32 %v292, %v293
  %v319 = vrot.slane %v318, 4
  %v320 = vmax.f32 %v318, %v319
  %v321 = vrot.slane %v320, 2
  %v322 = vmax.f32 %v320, %v321
  %v323 = vrot.slane %v322, 1
  %v324 = vmax.f32 %v322, %v323
  %v325 = vmax.f32 %v294, %v295
  %v326 = vrot.slane %v325, 4
  %v327 = vmax.f32 %v325, %v326
  %v328 = vrot.slane %v327, 2
  %v329 = vmax.f32 %v327, %v328
  %v330 = vrot.slane %v329, 1
  %v331 = vmax.f32 %v329, %v330
  %v332 = vmax.f32 %v296, %v297
  %v333 = vrot.slane %v332, 4
  %v334 = vmax.f32 %v332, %v333
  %v335 = vrot.slane %v334, 2
  %v336 = vmax.f32 %v334, %v335
  %v337 = vrot.slane %v336, 1
  %v338 = vmax.f32 %v336, %v337
  %v339 = vmax.f32 %v298, %v299
  %v340 = vrot.slane %v339, 4
  %v341 = vmax.f32 %v339, %v340
  %v342 = vrot.slane %v341, 2
  %v343 = vmax.f32 %v341, %v342
  %v344 = vrot.slane %v343, 1
  %v345 = vmax.f32 %v343, %v344
  %v346 = vmax.f32 %v300, %v301
  %v347 = vrot.slane %v346, 4
  %v348 = vmax.f32 %v346, %v347
  %v349 = vrot.slane %v348, 2
  %v350 = vmax.f32 %v348, %v349
  %v351 = vrot.slane %v350, 1
  %v352 = vmax.f32 %v350, %v351
  %v353 = vmax.f32 %v302, %v303
  %v354 = vrot.slane %v353, 4
  %v355 = vmax.f32 %v353, %v354
  %v356 = vrot.slane %v355, 2
  %v357 = vmax.f32 %v355, %v356
  %v358 = vrot.slane %v357, 1
  %v359 = vmax.f32 %v357, %v358
  %v360 = vpack.c.bf16 %v310, %v310
  %v361 = vpack.c.bf16 %v317, %v317
  %v362 = vpack.c.bf16 %v324, %v324
  %v363 = vpack.c.bf16 %v331, %v331
  %v364 = vpack.c.bf16 %v338, %v338
  %v365 = vpack.c.bf16 %v345, %v345
  %v366 = vpack.c.bf16 %v352, %v352
  %v367 = vpack.c.bf16 %v359, %v359
  %v368 = vld [vmem:[%s4] sm:$0xf]
  %v369 = vld [vmem:[%s4 + $0x4] sm:$0xf]
  %v370 = vld [vmem:[%s4 + $0x8] sm:$0xf]
  %v371 = vld [vmem:[%s4 + $0xc] sm:$0xf]
  %v372 = vld [vmem:[%s4 + $0x10] sm:$0xf]
  %v373 = vld [vmem:[%s4 + $0x14] sm:$0xf]
  %v374 = vld [vmem:[%s4 + $0x18] sm:$0xf]
  %v375 = vld [vmem:[%s4 + $0x1c] sm:$0xf]
  %v376 = vld [vmem:[%s4 + $0x20] sm:$0xf]
  %v377 = vld [vmem:[%s4 + $0x24] sm:$0xf]
  %v378 = vld [vmem:[%s4 + $0x28] sm:$0xf]
  %v379 = vld [vmem:[%s4 + $0x2c] sm:$0xf]
  %v380 = vld [vmem:[%s4 + $0x30] sm:$0xf]
  %v381 = vld [vmem:[%s4 + $0x34] sm:$0xf]
  %v382 = vld [vmem:[%s4 + $0x38] sm:$0xf]
  %v383 = vld [vmem:[%s4 + $0x3c] sm:$0xf]
  %v384 = vld [vmem:[%s5] sm:$0x1]
  %v386 = vlaneseq
  %v387 = vshrl.u32 %v386, 7
  %v388 = vsub.s32 0, %v387
  %v389 = vrot.slane %v384, %v388
  %v399 = vunpack.c.l.b16 %v360
  %v400 = vunpack.c.l.b16 %v361
  %v401 = vunpack.c.l.b16 %v362
  %v402 = vunpack.c.l.b16 %v363
  %v403 = vunpack.c.l.b16 %v364
  %v404 = vunpack.c.l.b16 %v365
  %v405 = vunpack.c.l.b16 %v366
  %v406 = vunpack.c.l.b16 %v367
  %vm407 = vcmask 1041409
  %v408 = vsel %vm407, %v400, %v399
  %vm409 = vcmask 1042434
  %v410 = vsel %vm409, %v401, %v408
  %vm411 = vcmask 1043459
  %v412 = vsel %vm411, %v402, %v410
  %vm413 = vcmask 1044484
  %v414 = vsel %vm413, %v403, %v412
  %vm415 = vcmask 1045509
  %v416 = vsel %vm415, %v404, %v414
  %vm417 = vcmask 1046534
  %v418 = vsel %vm417, %v405, %v416
  %vm419 = vcmask 1047559
  %v420 = vsel %vm419, %v406, %v418
  %v421 = vpack.c.b16 %v420, %v420
  %v439 = vunpack.c.l.b16 %v368
  %v440 = vunpack.c.l.b16 %v369
  %v441 = vunpack.c.l.b16 %v370
  %v442 = vunpack.c.l.b16 %v371
  %v443 = vunpack.c.l.b16 %v372
  %v444 = vunpack.c.l.b16 %v373
  %v445 = vunpack.c.l.b16 %v374
  %v446 = vunpack.c.l.b16 %v375
  %v447 = vunpack.c.l.b16 %v376
  %v448 = vunpack.c.l.b16 %v377
  %v449 = vunpack.c.l.b16 %v378
  %v450 = vunpack.c.l.b16 %v379
  %v451 = vunpack.c.l.b16 %v380
  %v452 = vunpack.c.l.b16 %v381
  %v453 = vunpack.c.l.b16 %v382
  %v454 = vunpack.c.l.b16 %v383
  %v455 = vpack.c.b16 %v440, %v439
  %v456 = vpack.c.b16 %v442, %v441
  %v457 = vpack.c.b16 %v444, %v443
  %v458 = vpack.c.b16 %v446, %v445
  %v459 = vpack.c.b16 %v448, %v447
  %v460 = vpack.c.b16 %v450, %v449
  %v461 = vpack.c.b16 %v452, %v451
  %v462 = vpack.c.b16 %v454, %v453
  %471 = vmatprep.subr.bf16.mxu0 0
  %472 = vmatpush1.bf16.msra.mxu0 %v455
  %473 = vmatprep.subr.bf16.mxu0 0
  %474 = vmatpush1.bf16.msra.mxu0 %v456
  %475 = vmatprep.subr.bf16.mxu0 0
  %476 = vmatpush1.bf16.msra.mxu0 %v457
  %477 = vmatprep.subr.bf16.mxu0 0
  %478 = vmatpush1.bf16.msra.mxu0 %v458
  %479 = vmatprep.subr.bf16.mxu0 0
  %480 = vmatpush1.bf16.msra.mxu0 %v459
  %481 = vmatprep.subr.bf16.mxu0 0
  %482 = vmatpush1.bf16.msra.mxu0 %v460
  %483 = vmatprep.subr.bf16.mxu0 0
  %484 = vmatpush1.bf16.msra.mxu0 %v461
  %485 = vmatprep.subr.bf16.mxu0 0
  %486 = vmatpush1.bf16.msra.mxu0 %v462
  %487 = vmatprep.subr.bf16.mxu0 0
  %488 = vmatpush1.bf16.msra.mxu0 0
  %489 = vmatprep.subr.bf16.mxu0 0
  %490 = vmatpush1.bf16.msra.mxu0 0
  %491 = vmatprep.subr.bf16.mxu0 0
  %492 = vmatpush1.bf16.msra.mxu0 0
  %493 = vmatprep.subr.bf16.mxu0 0
  %494 = vmatpush1.bf16.msra.mxu0 0
  %495 = vmatprep.subr.bf16.mxu0 0
  %496 = vmatpush1.bf16.msra.mxu0 0
  %497 = vmatprep.subr.bf16.mxu0 0
  %498 = vmatpush1.bf16.msra.mxu0 0
  %499 = vmatprep.subr.bf16.mxu0 0
  %500 = vmatpush1.bf16.msra.mxu0 0
  %501 = vmatprep.subr.bf16.mxu0 0
  %502 = vmatpush1.bf16.msra.mxu0 0
  %503 = vmatprep.mubr.bf16.mxu0 0
  %504 = vmatmul.mubr.bf16.gmra.mrb[0].mxu0 %v421
  %v505 = vpop.f32.mrb[0].mxu0
  %v506 = vadd.f32 %v389, %v505
  %v507 = vpop.f32.mrb[0].mxu0
  %v508 = vpop.f32.mrb[0].mxu0
  %v509 = vpop.f32.mrb[0].mxu0
  %510 = vdwg.mxu0
  %511 = vst [vmem:[%s6] sm:$0xff] %v506
  // Predicated region
  $region26: #{simple_cnn_forward.1} parent=0 // pred_check
    _
  $region27: #{simple_cnn_forward.1} parent=0 // pred_check_branch
    %513 = sbr.rel (0) target = $region29
  $region28: #{simple_cnn_forward.1} parent=0 // pred_region
    _
  $region29: #{simple_cnn_forward.1} parent=0 // pred_fallthru
    _
  // Predicated region
  $region30: #{simple_cnn_forward.1} parent=0 // pred_check
    _
  $region31: #{simple_cnn_forward.1} parent=0 // pred_check_branch
    %515 = sbr.rel (0) target = $region33
  $region32: #{simple_cnn_forward.1} parent=0 // pred_region
    _
  $region33: #{simple_cnn_forward.1} parent=0 // pred_fallthru
    _

</llo_original>
